<compile_context>
chip_gen: v7x
topology: tpu7x:2x2x1
jax: 0.10.0
libtpu: 0.0.40
codegen_flags: <defaults>
</compile_context>

<pallas_src>
import functools
import math

import jax
import jax.numpy as jnp
import numpy as np
from jax.experimental import pallas as pl
from jax.experimental.pallas import tpu as pltpu

MATMUL_DTYPE = jnp.bfloat16      # MXU input dtype (accumulation is always f32)


def _round_up(x, m):
    return ((x + m - 1) // m) * m


def _cdiv(a, b):
    return -(-a // b)


# ---------------------------------------------------------------------------
# Build-time hardware probes
# ---------------------------------------------------------------------------

def _has_bf16_vpu():
    """v6e/v7x have a bf16 VPU; v5-class chips emulate bf16 elementwise."""
    try:
        kind = jax.devices()[0].device_kind.lower()
        return "v5" not in kind
    except Exception:
        return True


def _num_tensorcores():
    """Heuristic: 2 TensorCores per chip on v7x, 1 on v5e/v6e."""
    try:
        kind = jax.devices()[0].device_kind.lower()
        return 2 if "v7" in kind else 1
    except Exception:
        return 1


def _roll_sign_impl(dtype, interpret):
    """Probe pltpu.roll's shift convention (and that it lowers for `dtype`):
    +1 if it matches jnp.roll (out[i] = x[i - shift]), else -1."""
    def k(x_ref, o_ref):
        o_ref[...] = pltpu.roll(x_ref[...], 1, axis=1)

    x = jax.lax.broadcasted_iota(jnp.float32, (16, 128), 1).astype(dtype)
    out_shape = jax.ShapeDtypeStruct((16, 128), dtype)
    if interpret:
        with pltpu.force_tpu_interpret_mode():
            y = pl.pallas_call(k, out_shape=out_shape)(x)
    else:
        y = pl.pallas_call(k, out_shape=out_shape)(x)
    return 1 if float(y[0, 1]) == 0.0 else -1


@functools.lru_cache(maxsize=None)
def _pick_elementwise_dtype():
    """(elementwise dtype for the im2col slab, pltpu.roll sign)."""
    if _has_bf16_vpu():
        try:
            return jnp.bfloat16, _roll_sign_impl(jnp.bfloat16, False)
        except Exception:
            pass
    try:
        return jnp.float32, _roll_sign_impl(jnp.float32, False)
    except Exception:
        # No TPU at build time (AOT / CPU): learn the convention via interpret.
        return jnp.float32, _roll_sign_impl(jnp.float32, True)


# ---------------------------------------------------------------------------
# Host-side constant tables (built once at encoder-build time)
# ---------------------------------------------------------------------------

def _tap_masks(H, W, B, dtype):
    """(9, B*H*W) 0/1 masks: mask[t, b*H*W + y*W + x] = 1 iff tap t's source
    pixel lies inside image b.  Implements 'same' zero padding AND isolates
    lane-batched images from each other (rolled taps crossing an image
    boundary are exactly the out-of-image taps, so they get zeroed)."""
    m = np.zeros((9, H * W), np.float32)
    t = 0
    for dy in (-1, 0, 1):
        for dx in (-1, 0, 1):
            yv = np.arange(H)[:, None] + dy
            xv = np.arange(W)[None, :] + dx
            ok = (yv >= 0) & (yv < H) & (xv >= 0) & (xv < W)
            m[t] = ok.astype(np.float32).reshape(-1)
            t += 1
    return jnp.asarray(np.tile(m, (1, B)), dtype)


def _pool_select(H, W, B):
    """(B*H*W, B*(H//2)*(W//2)) block-diagonal 0/1 decimation matrix selecting
    the top-left lane of every 2x2 window of every image (exact in bf16)."""
    H2, W2 = H // 2, W // 2
    hw, hw2 = H * W, H2 * W2
    yq, xq = np.meshgrid(np.arange(H2), np.arange(W2), indexing="ij")
    src = (2 * yq * W + 2 * xq).reshape(-1)
    dst = (yq * W2 + xq).reshape(-1)
    sel = np.zeros((B * hw, B * hw2), np.float32)
    for b in range(B):
        sel[b * hw + src, b * hw2 + dst] = 1.0
    return jnp.asarray(sel, MATMUL_DTYPE)


def _avg_matrix(hw, B):
    """(B*hw, B) block matrix of 1/hw: global average pool as one matmul so
    the FC head runs at lane width B (1/64 etc. is exact in bf16)."""
    m = np.zeros((B * hw, B), np.float32)
    for b in range(B):
        m[b * hw:(b + 1) * hw, b] = 1.0 / hw
    return jnp.asarray(m, MATMUL_DTYPE)


# ---------------------------------------------------------------------------
# Weight prep (once, at build time)
# ---------------------------------------------------------------------------

def _prep_conv(w_hwio, b, cin_pad, cout_pad):
    """HWIO conv weight -> (Cout_pad, 9*Cin_pad) im2col matrix (MATMUL_DTYPE)
    plus (Cout_pad, 1) f32 bias column."""
    kh, kw, cin, cout = w_hwio.shape
    w_p = jnp.pad(w_hwio.astype(jnp.float32),
                  ((0, 0), (0, 0), (0, cin_pad - cin), (0, cout_pad - cout)))
    wmat = w_p.reshape(kh * kw * cin_pad, cout_pad).T.astype(MATMUL_DTYPE)
    bcol = jnp.pad(b.astype(jnp.float32), (0, cout_pad - cout)).reshape(cout_pad, 1)
    return wmat, bcol


def _prep_fc(w_oi, b, fin_pad):
    """(out, in) Linear weight -> (out, fin_pad) MATMUL_DTYPE, (out, 1) f32 bias."""
    fout, fin = w_oi.shape
    w_p = jnp.pad(w_oi.astype(jnp.float32), ((0, 0), (0, fin_pad - fin)))
    return w_p.astype(MATMUL_DTYPE), b.astype(jnp.float32).reshape(fout, 1)


# ---------------------------------------------------------------------------
# Kernel-side helpers (trace-time Python; operate on values + weight refs)
# ---------------------------------------------------------------------------

def _shift_lanes(a, s, roll_sign):
    """Bring the value from lane (i + s) to lane i (cyclic; callers mask or
    discard the wrapped lanes)."""
    L = a.shape[-1]
    return pltpu.roll(a, (-roll_sign * s) % L, axis=1)


def _im2col_3x3(a_f32, mask_ref, W, roll_sign, ew_dtype):
    """(Cin_pad, B*H*W) activation -> (9*Cin_pad, B*H*W) patch slab in
    MATMUL_DTYPE.  Each tap is one XLU lane-roll of the flat spatial axis,
    multiplied by a 0/1 border mask ('same' zero padding + image isolation)."""
    a = a_f32.astype(ew_dtype)
    taps = []
    t = 0
    for dy in (-1, 0, 1):
        for dx in (-1, 0, 1):
            s = dy * W + dx
            if s == 0:
                taps.append(a)                          # center: always valid
            else:
                taps.append(_shift_lanes(a, s, roll_sign) * mask_ref[t:t + 1, :])
            t += 1
    return jnp.concatenate(taps, axis=0).astype(MATMUL_DTYPE)


def _conv_head(patches, w_ref, b_ref):
    """Single MXU matmul for the (possibly stacked main+skip) conv + bias + ReLU."""
    out = jnp.dot(w_ref[...], patches, preferred_element_type=jnp.float32)
    return jnp.maximum(out + b_ref[...], 0.0)


def _maxpool_2x2(y, sel_ref, W, roll_sign):
    """(C, B*H*W) -> (C, B*H*W//4) 2x2/stride-2 max-pool: rolls + elementwise
    max put every window's max on its top-left lane, then ONE bf16 decimation
    matmul picks those lanes.  Lanes contaminated by rolls that wrapped across
    a row / image boundary are never selected by the decimation matrix."""
    m = y
    for s in (1, W, W + 1):
        m = jnp.maximum(m, _shift_lanes(y, s, roll_sign))
    return jnp.dot(m.astype(MATMUL_DTYPE), sel_ref[...],
                   preferred_element_type=jnp.float32)


# ---------------------------------------------------------------------------
# Builder: prepares constants once and returns forward(x_nchw)
# ---------------------------------------------------------------------------

def build_basic_encoder(params, *, num_channels, height, width, rate=2,
                        use_skip=True, batch_per_step=None):
    ew_dtype, roll_sign = _pick_elementwise_dtype()

    n_conv = len(params["conv"])
    ch, cw = height, width
    for idx in range(n_conv):
        if (idx + 1) % rate == 0:
            ch //= 2
            cw //= 2
    hw_last = ch * cw

    # Per-grid-step image batch B: keep B * (deepest-pooled spatial) >= 128 so
    # post-pool convs, the decimation matmuls, and the FC head stay lane-dense
    # and per-step overhead is amortized.  On v7x (2 TCs) halve it so a small N
    # still produces >= 2 grid steps for the "parallel" grid axis.
    if batch_per_step is None:
        batch_per_step = min(8, max(1, _cdiv(128, hw_last)))
        if _num_tensorcores() >= 2:
            batch_per_step = max(1, batch_per_step // 2)
    B = int(batch_per_step)

    const_inputs = []          # masks / selection matrices / weights / biases
    const_specs = []

    def _add_const(arr):
        const_inputs.append(arr)
        const_specs.append(
            pl.BlockSpec(arr.shape, lambda i, _nd=arr.ndim: (0,) * _nd))
        return len(const_inputs)                       # ref index (x is ref 0)

    mask_cache, sel_cache = {}, {}

    def _mask_idx(h, w):
        if (h, w) not in mask_cache:
            mask_cache[(h, w)] = _add_const(_tap_masks(h, w, B, ew_dtype))
        return mask_cache[(h, w)]

    def _sel_idx(h, w):
        if (h, w) not in sel_cache:
            sel_cache[(h, w)] = _add_const(_pool_select(h, w, B))
        return sel_cache[(h, w)]

    # -- conv layer plan ----------------------------------------------------
    conv_plan = []
    cur_c = num_channels
    cur_c_pad = _round_up(num_channels, 16)   # 16: bf16 (16,128) tile alignment
    cur_h, cur_w = height, width
    s_idx = 0
    for idx, p in enumerate(params["conv"]):
        cout = p["w"].shape[-1]
        cout_pad = _round_up(cout, 16)
        assert p["w"].shape[2] == cur_c, "conv in_channels mismatch"
        wmat, bcol = _prep_conv(p["w"], p["b"], cur_c_pad, cout_pad)
        is_nxt = (idx + 1) % rate == 0
        fused_skip = use_skip and is_nxt
        if fused_skip:
            sp = params["skip"][s_idx]
            s_idx += 1
            assert sp["w"].shape[2] == cur_c, "skip in_channels mismatch"
            swmat, sbcol = _prep_conv(sp["w"], sp["b"], cur_c_pad, cout_pad)
            wmat = jnp.concatenate([wmat, swmat], axis=0)   # stack both branches
            bcol = jnp.concatenate([bcol, sbcol], axis=0)
        conv_plan.append({
            "iw": cur_w,
            "wi": _add_const(wmat), "bi": _add_const(bcol),
            "mi": _mask_idx(cur_h, cur_w),
            "pool": is_nxt,
            "si": _sel_idx(cur_h, cur_w) if is_nxt else None,
            "split": cout_pad if fused_skip else None,
        })
        cur_c, cur_c_pad = cout, cout_pad
        if is_nxt:
            cur_h, cur_w = cur_h // 2, cur_w // 2

    # -- global average pool + FC plan ---------------------------------------
    avg_idx = _add_const(_avg_matrix(hw_last, B))
    fc_plan = []
    fin_pad = cur_c_pad
    f_last = cur_c
    for p in params["fc"]:
        fout = p["w"].shape[0]
        wfc, bfc = _prep_fc(p["w"], p["b"], fin_pad)
        fc_plan.append({"wi": _add_const(wfc), "bi": _add_const(bfc)})
        fin_pad = fout
        f_last = fout

    c0 = num_channels
    c0_pad = _round_up(num_channels, 16)
    hw0 = height * width

    # -- fused kernel ---------------------------------------------------------
    def kernel(*refs):
        o_ref = refs[-1]
        x_ref = refs[0]                                 # (B, C0, H0*W0) f32
        # Lay the B images side-by-side on the lane axis and zero-pad the
        # channel (sublane) axis in VMEM -- no padded HBM copy of the input.
        a = jnp.concatenate([x_ref[b] for b in range(B)], axis=1)
        if c0_pad > c0:
            a = jnp.concatenate(
                [a, jnp.zeros((c0_pad - c0, a.shape[1]), a.dtype)], axis=0)
        for lyr in conv_plan:
            patches = _im2col_3x3(a, refs[lyr["mi"]], lyr["iw"], roll_sign,
                                  ew_dtype)
            z = _conv_head(patches, refs[lyr["wi"]], refs[lyr["bi"]])
            if lyr["pool"]:
                z = _maxpool_2x2(z, refs[lyr["si"]], lyr["iw"], roll_sign)
            if lyr["split"] is not None:                # fused main + skip add
                c = lyr["split"]
                z = z[:c] + z[c:]
            a = z
        # AdaptiveAvgPool2d((1,1)) + flatten as one matmul -> (C_pad, B).
        feat = jnp.dot(a.astype(MATMUL_DTYPE), refs[avg_idx][...],
                       preferred_element_type=jnp.float32)
        for fc in fc_plan:
            z = jnp.dot(refs[fc["wi"]][...], feat.astype(MATMUL_DTYPE),
                        preferred_element_type=jnp.float32)
            feat = jnp.maximum(z + refs[fc["bi"]][...], 0.0)
        o_ref[...] = feat[:f_last].reshape(1, f_last, B)

    # -- public forward -------------------------------------------------------
    def forward(x_nchw):
        n, c, hh, ww = x_nchw.shape
        assert (c, hh, ww) == (num_channels, height, width)
        nsteps = _cdiv(n, B)
        n_pad = nsteps * B
        x = x_nchw.reshape(n, c, hh * ww).astype(jnp.float32)   # free reshape
        if n_pad != n:
            x = jnp.concatenate(
                [x, jnp.zeros((n_pad - n, c, hh * ww), jnp.float32)], axis=0)
        out = pl.pallas_call(
            kernel,
            out_shape=jax.ShapeDtypeStruct((nsteps, f_last, B), jnp.float32),
            grid=(nsteps,),
            in_specs=[pl.BlockSpec((B, c, hh * ww), lambda i: (i, 0, 0))]
                     + const_specs,
            out_specs=pl.BlockSpec((1, f_last, B), lambda i: (i, 0, 0)),
            compiler_params=pltpu.CompilerParams(
                dimension_semantics=("parallel",),
                # Budgeted against v7x's 64 MiB VMEM; at 16x16 / B<=8 the
                # activations + im2col slab + constants are far below this.
                vmem_limit_bytes=32 * 1024 * 1024),
        )(x, *const_inputs)
        # (nsteps, f_last, B) -> (N, f_last)
        out = jnp.transpose(out, (0, 2, 1)).reshape(n_pad, f_last)
        return out[:n]

    return forward


# ---------------------------------------------------------------------------
# Deterministic parameter init + pure-JAX reference (unchanged semantics)
# ---------------------------------------------------------------------------

def init_params(key, num_channels, hidden_sizes, fc_hidden_sizes, *, rate=2,
                use_skip=True):
    params = {"conv": [], "skip": [], "fc": []}
    cin = num_channels
    for idx, dim in enumerate(hidden_sizes):
        key, k1, k2 = jax.random.split(key, 3)
        w = jax.random.normal(k1, (3, 3, cin, dim), jnp.float32) / math.sqrt(9 * cin)
        b = 0.1 * jax.random.normal(k2, (dim,), jnp.float32)
        params["conv"].append({"w": w, "b": b})
        if use_skip and (idx + 1) % rate == 0:
            key, k3, k4 = jax.random.split(key, 3)
            scin = hidden_sizes[idx + 1 - rate]
            sw = jax.random.normal(k3, (3, 3, scin, dim), jnp.float32) / math.sqrt(9 * scin)
            sb = 0.1 * jax.random.normal(k4, (dim,), jnp.float32)
            params["skip"].append({"w": sw, "b": sb})
        cin = dim
    for dim in fc_hidden_sizes:
        key, k5, k6 = jax.random.split(key, 3)
        w = jax.random.normal(k5, (dim, cin), jnp.float32) / math.sqrt(cin)  # (out,in)
        b = 0.1 * jax.random.normal(k6, (dim,), jnp.float32)
        params["fc"].append({"w": w, "b": b})
        cin = dim
    return params


def _ref_conv_block(x, w, b, pool):
    y = jax.lax.conv_general_dilated(
        x, w, window_strides=(1, 1), padding="SAME",
        dimension_numbers=("NHWC", "HWIO", "NHWC"))
    y = jnp.maximum(y + b, 0.0)
    if pool:
        N, H, W, C = y.shape
        y = y.reshape(N, H // 2, 2, W // 2, 2, C).max(axis=(2, 4))
    return y


def reference_forward(x_nchw, params, *, rate=2, use_skip=True):
    x = jnp.transpose(x_nchw, (0, 2, 3, 1))
    y = x
    s_idx = 0
    for idx, p in enumerate(params["conv"]):
        is_nxt = (idx + 1) % rate == 0
        x_out = _ref_conv_block(y, p["w"], p["b"], is_nxt)
        if use_skip and is_nxt:
            sp = params["skip"][s_idx]
            s_idx += 1
            y = x_out + _ref_conv_block(y, sp["w"], sp["b"], True)
        else:
            y = x_out
    feat = jnp.mean(y, axis=(1, 2))
    for p in params["fc"]:
        feat = jnp.maximum(feat @ p["w"].T + p["b"], 0.0)
    return feat


# ---------------------------------------------------------------------------
# Demo
# ---------------------------------------------------------------------------

if __name__ == "__main__":
    NUM_CHANNELS = 4
    HIDDEN_SIZES = [8, 16]       # rate=2 -> 2nd block downsamples + skip branch
    FC_HIDDEN_SIZES = [32, 8]
    RATE = 2
    USE_SKIP = True
    HEIGHT = WIDTH = 16

    key = jax.random.PRNGKey(0)
    kx, kp = jax.random.split(key)
    x = jax.random.normal(kx, (2, NUM_CHANNELS, HEIGHT, WIDTH), jnp.float32)

    params = init_params(kp, NUM_CHANNELS, HIDDEN_SIZES, FC_HIDDEN_SIZES,
                         rate=RATE, use_skip=USE_SKIP)

    forward = build_basic_encoder(params, num_channels=NUM_CHANNELS,
                                  height=HEIGHT, width=WIDTH,
                                  rate=RATE, use_skip=USE_SKIP)
    out = jax.block_until_ready(forward(x))

    ref = reference_forward(x, params, rate=RATE, use_skip=USE_SKIP)
    assert out.shape == (2, FC_HIDDEN_SIZES[-1]), out.shape
    # bf16 MXU inputs (f32 accumulation) vs. a pure-f32 reference ->
    # percent-level tolerance.
    np.testing.assert_allclose(np.asarray(out), np.asarray(ref),
                               rtol=3e-2, atol=3e-2)
    print("KERNEL_OK")
</pallas_src>

<mosaic_0001>
module attributes {stable_mosaic.version = 11 : i64} {
  func.func @k(%arg0: memref<16x128xbf16, #tpu.memory_space<vmem>>, %arg1: memref<16x128xbf16, #tpu.memory_space<vmem>>) attributes {dimension_semantics = [], scalar_prefetch = 0 : i64, scratch_operands = 0 : i64, tpu.core_type = #tpu.core_type<tc>} {
    %c0 = arith.constant 0 : index
    %c0_0 = arith.constant 0 : index
    %0 = vector.load %arg0[%c0, %c0_0] : memref<16x128xbf16, #tpu.memory_space<vmem>>, vector<16x128xbf16>
    %c1_i32 = arith.constant 1 : i32
    %1 = tpu.dynamic_rotate %0 by %c1_i32 dim 1 : vector<16x128xbf16>, i32 -> vector<16x128xbf16>
    %c0_1 = arith.constant 0 : index
    %c0_2 = arith.constant 0 : index
    %2 = vector.load %arg1[%c0_1, %c0_2] : memref<16x128xbf16, #tpu.memory_space<vmem>>, vector<16x128xbf16>
    tpu.vector_store %arg1[%c0_1, %c0_2], %1 {strides = array<i32>} : memref<16x128xbf16, #tpu.memory_space<vmem>>, vector<16x128xbf16>,
    return
  }
}

module attributes {stable_mosaic.version = 11 : i64} {
  func.func @k(%arg0: memref<16x128xf32, #tpu.memory_space<vmem>>, %arg1: memref<16x128xf32, #tpu.memory_space<vmem>>) attributes {dimension_semantics = [], scalar_prefetch = 0 : i64, scratch_operands = 0 : i64, tpu.core_type = #tpu.core_type<tc>} {
    %c0 = arith.constant 0 : index
    %c0_0 = arith.constant 0 : index
    %0 = vector.load %arg0[%c0, %c0_0] : memref<16x128xf32, #tpu.memory_space<vmem>>, vector<16x128xf32>
    %c1_i32 = arith.constant 1 : i32
    %1 = tpu.dynamic_rotate %0 by %c1_i32 dim 1 : vector<16x128xf32>, i32 -> vector<16x128xf32>
    %c0_1 = arith.constant 0 : index
    %c0_2 = arith.constant 0 : index
    %2 = vector.load %arg1[%c0_1, %c0_2] : memref<16x128xf32, #tpu.memory_space<vmem>>, vector<16x128xf32>
    tpu.vector_store %arg1[%c0_1, %c0_2], %1 {strides = array<i32>} : memref<16x128xf32, #tpu.memory_space<vmem>>, vector<16x128xf32>,
    return
  }
}

</mosaic_0001>

<llo_original>
// kernel: tpu_custom_call.1
$region0: #{tpu_custom_call.1}
  #allocation0 [shape = 'u32[]', space=smem, size = 0x4, offset = 0x4, fixed_abs, tag = 'smem constant byte address 0x4 - core index']
  #allocation1 [shape = 'u32[144,128]{1,0:T(1,128)}', space=vmem, size = 0x12000, scoped, tag = 'internal scratch']
  %s0 = inlined_call_operand.hbm [shape: f32[16,128], index: 0, kind: input, shape index: {}]
  %s1 = inlined_call_operand.hbm [shape: f32[16,128], index: 1, kind: output, shape index: {}]
  %s2 = sld [smem:[#allocation0]]
  $region18: #{tpu_custom_call.1} parent=0
    _
  %s4 = ssub.s32 1, %s2
  %s5 = scalar_select 0, %s4, %s2
  $region1: #{tpu_custom_call.1} parent=0
    #allocation2 [shape = 'u8[8192]{0}', space=vmem, size = 0x2000, scoped, tag = 'input window, operand 0, single buffered']
    #allocation3 [shape = 's32[1]{0}', space=sflag, size = 0x4, scoped, tag = 'scoped memory for tpu_custom_call.1']
    #allocation4 [shape = 's32[1]{0}', space=sflag, size = 0x4, scoped, tag = 'scoped memory for tpu_custom_call.1']
    #allocation5 [shape = 'u8[8192]{0}', space=vmem, size = 0x2000, scoped, tag = 'output window, operand 0, single buffered']
    %6 = vsyncpa [#allocation3], 0
    %7 = vsyncpa [#allocation4], 0
    // Predicated region
    $region2: #{tpu_custom_call.1} parent=1 // pred_check
      _
    $region3: #{tpu_custom_call.1} parent=1 // pred_check_branch
      %9 = sbr.rel (0) target = $region5
    $region4: #{tpu_custom_call.1} parent=1 // pred_region
      %s11 = ssub.s32 256, 256
      %12 = vsyncadd [#allocation3], %s11
      %s13 = sshll.u32 [#allocation2], 4
      %s14 = int_to_ptr.vmem [resolvable:$true] %s13
      %19 = dma.hbm_to_vmem [thread:$0]  %s0, 256, %s14, [#allocation3], 128, 128, 8
    $region5: #{tpu_custom_call.1} parent=1 // pred_fallthru
      _
    // Predicated region
    $region6: #{tpu_custom_call.1} parent=1 // pred_check
      _
    $region7: #{tpu_custom_call.1} parent=1 // pred_check_branch
      %21 = sbr.rel (0) target = $region9
    $region8: #{tpu_custom_call.1} parent=1 // pred_region
      %22 = dma.done [#allocation3], 256
    $region9: #{tpu_custom_call.1} parent=1 // pred_fallthru
      _
    %v23 = vld [vmem:[#allocation2] sm:$0xff]
    %v24 = vld [vmem:[#allocation2 + $0x8] sm:$0xff]
    %25 = vrot.lane.b32.xlu0 %v23, 1
    %v26 = vpop.permute.xlu0 %25
    %27 = vrot.lane.b32.xlu0 %v24, 1
    %v28 = vpop.permute.xlu0 %27
    %29 = vst [vmem:[#allocation5] sm:$0xff] %v26
    %30 = vst [vmem:[#allocation5 + $0x8] sm:$0xff] %v28
    // Predicated region
    $region10: #{tpu_custom_call.1} parent=1 // pred_check
      _
    $region11: #{tpu_custom_call.1} parent=1 // pred_check_branch
      %32 = sbr.rel (0) target = $region13
    $region12: #{tpu_custom_call.1} parent=1 // pred_region
      %s34 = ssub.s32 256, 256
      %35 = vsyncadd [#allocation4], %s34
      %s36 = sshll.u32 [#allocation5], 4
      %s37 = int_to_ptr.vmem [resolvable:$true] %s36
      %42 = dma.vmem_to_hbm [thread:$0]  %s37, 256, %s1, [#allocation4], 128, 128, 8
    $region13: #{tpu_custom_call.1} parent=1 // pred_fallthru
      _
    // Predicated region
    $region14: #{tpu_custom_call.1} parent=1 // pred_check
      _
    $region15: #{tpu_custom_call.1} parent=1 // pred_check_branch
      %44 = sbr.rel (0) target = $region17
    $region16: #{tpu_custom_call.1} parent=1 // pred_region
      %45 = dma.done [#allocation4], 256
    $region17: #{tpu_custom_call.1} parent=1 // pred_fallthru
      _
    %46 = vsyncpa [#allocation3], 1
    %47 = vsyncpa [#allocation4], 1

</llo_original>
